<compile_context>
chip_gen: v6e
topology: v6e:2x2x1
jax: 0.10.0
libtpu: 0.0.40
codegen_flags: <defaults>
</compile_context>

<pallas_src>
import jax
import jax.numpy as jnp
from jax.experimental import pallas as pl
from jax.experimental.pallas import tpu as pltpu

LANES = 128                              # vreg lane width
WIDE = 1024                              # 8 vregs wide -> wide unmasked vst
TARGET_TILE_BYTES = 2 * 1024 * 1024      # ~2 MiB / tile; x4 (in+out, dbl-buf) = 8 MiB VMEM
MAX_SINGLE_BLOCK_BYTES = 4 * 1024 * 1024 # small arrays: one block == full array
MIN_ROWS_FOR_SPLIT = 16                  # v7x: ensure >= 2 grid steps once there is real work
VMEM_LIMIT_BYTES = 32 * 1024 * 1024      # explicit scoped-VMEM limit (safe on v5e/v6e/v7x)


def _affine_kernel(a_ref, b_ref, x_ref, o_ref):
    # a_ref, b_ref: (1,) scalars in SMEM; x_ref / o_ref: lane-dense VMEM tiles.
    o_ref[...] = a_ref[0] + b_ref[0] * x_ref[...]


def _max_tile_rows(width, itemsize):
    r = TARGET_TILE_BYTES // (width * itemsize)
    return max(8, (r // 8) * 8)


def _pick_tile_rows(rows, width, itemsize):
    """Tile row count that divides `rows`, is a multiple of 8, stays under the
    ~2 MiB/tile VMEM target, and yields >= 2 grid steps (v7x megacore)."""
    assert rows % 8 == 0 and rows >= MIN_ROWS_FOR_SPLIT
    t = min(_max_tile_rows(width, itemsize), (rows // 2) // 8 * 8)
    t = max(t, 8)
    while rows % t != 0:   # shrink to a divisor; trace-time Python, cheap
        t -= 8
    return t


def _run_affine(a, b, x2d, tile_rows):
    rows, width = x2d.shape
    grid = (rows // tile_rows,)
    return pl.pallas_call(
        _affine_kernel,
        out_shape=jax.ShapeDtypeStruct((rows, width), x2d.dtype),
        grid=grid,
        in_specs=[
            pl.BlockSpec(memory_space=pltpu.MemorySpace.SMEM),     # a
            pl.BlockSpec(memory_space=pltpu.MemorySpace.SMEM),     # b
            pl.BlockSpec((tile_rows, width), lambda i: (i, 0)),    # x tile
        ],
        out_specs=pl.BlockSpec((tile_rows, width), lambda i: (i, 0)),
        compiler_params=pltpu.CompilerParams(
            dimension_semantics=("parallel",),    # shard row-tiles across TCs (v7x)
            vmem_limit_bytes=VMEM_LIMIT_BYTES,
        ),
    )(a, b, x2d)


def manual_linear_regression(x, a, b):
    """Elementwise affine map y = a + b * x (ManualLinearRegression.forward)."""
    orig_shape = x.shape
    dtype = x.dtype
    itemsize = jnp.dtype(dtype).itemsize
    n = x.size
    a = a.reshape(-1).astype(dtype)
    b = b.reshape(-1).astype(dtype)
    flat = x.reshape(-1)  # free for a contiguous input

    # ---- zero-copy fast path: element count already lane-aligned ----------
    if n % LANES == 0:
        width = WIDE if n % WIDE == 0 else LANES
        rows = n // width
        if rows % 8 == 0 and rows >= MIN_ROWS_FOR_SPLIT:
            tile_rows = _pick_tile_rows(rows, width, itemsize)
            y2d = _run_affine(a, b, flat.reshape(rows, width), tile_rows)
            return y2d.reshape(orig_shape)
        if rows * width * itemsize <= MAX_SINGLE_BLOCK_BYTES:
            # one block == full array dims (no (8,128) divisibility requirement)
            y2d = _run_affine(a, b, flat.reshape(rows, width), rows)
            return y2d.reshape(orig_shape)
        # large but rows not a multiple of 8: fall through to the padded path

    # ---- padded path: only for sizes that are not a multiple of 128 -------
    # (e.g. the (100, 1) test case -> pad 100 -> 128; the extra copy here is
    # tiny / rare; lane-aligned production sizes never reach this branch)
    rows = pl.cdiv(n, LANES)
    if rows < MIN_ROWS_FOR_SPLIT:
        padded_rows = rows
        tile_rows = rows                      # single block == full padded array
    else:
        padded_rows = pl.cdiv(rows, 8) * 8
        tile_rows = _pick_tile_rows(padded_rows, LANES, itemsize)
    padded_n = padded_rows * LANES
    if padded_n != n:
        flat = jnp.pad(flat, (0, padded_n - n))
    y2d = _run_affine(a, b, flat.reshape(padded_rows, LANES), tile_rows)
    return y2d.reshape(-1)[:n].reshape(orig_shape)


# jit the wrapper so reshape / (rare) pad / slice fuse into one dispatch.
manual_linear_regression = jax.jit(manual_linear_regression)


if __name__ == "__main__":
    key = jax.random.PRNGKey(0)
    kx, ka, kb = jax.random.split(key, 3)

    # Matches the PyTorch module: x ~ (100, 1), a, b ~ randn(1)
    x = jax.random.uniform(kx, (100, 1), dtype=jnp.float32)
    a = jax.random.normal(ka, (1,), dtype=jnp.float32)
    b = jax.random.normal(kb, (1,), dtype=jnp.float32)

    y = manual_linear_regression(x, a, b)
    jax.block_until_ready(y)
    y_ref = a + b * x
    assert y.shape == x.shape
    assert jnp.allclose(y, y_ref, atol=1e-6, rtol=1e-6), "mismatch vs reference"

    # Also exercise the zero-copy, multi-tile "parallel" path on a small
    # lane-aligned input (128*128 elems -> (16, 1024) slab, 2 grid steps).
    x2 = jax.random.uniform(kx, (128, 128), dtype=jnp.float32)
    y2 = manual_linear_regression(x2, a, b)
    jax.block_until_ready(y2)
    assert jnp.allclose(y2, a + b * x2, atol=1e-6, rtol=1e-6), "mismatch (aligned path)"

    print("KERNEL_OK")
</pallas_src>

<mosaic_0001>
module attributes {stable_mosaic.version = 11 : i64} {
  func.func @_affine_kernel(%arg0: i32, %arg1: memref<1xf32, #tpu.memory_space<smem>>, %arg2: memref<1xf32, #tpu.memory_space<smem>>, %arg3: memref<1x128xf32, #tpu.memory_space<vmem>>, %arg4: memref<1x128xf32, #tpu.memory_space<vmem>>) attributes {dimension_semantics = [#tpu.dimension_semantics<parallel>], iteration_bounds = array<i64: 1>, scalar_prefetch = 0 : i64, scratch_operands = 0 : i64, tpu.core_type = #tpu.core_type<tc>, window_params = [{transform_indices = @transform_0, window_bounds = array<i64: 1>}, {transform_indices = @transform_1, window_bounds = array<i64: 1>}, {transform_indices = @transform_2, window_bounds = array<i64: 1, 128>}, {transform_indices = @transform_3, window_bounds = array<i64: 1, 128>}]} {
    %c0 = arith.constant 0 : index
    %0 = memref.load %arg1[%c0] : memref<1xf32, #tpu.memory_space<smem>>
    %c0_0 = arith.constant 0 : index
    %1 = memref.load %arg2[%c0_0] : memref<1xf32, #tpu.memory_space<smem>>
    %c0_1 = arith.constant 0 : index
    %c0_2 = arith.constant 0 : index
    %2 = vector.load %arg3[%c0_1, %c0_2] : memref<1x128xf32, #tpu.memory_space<vmem>>, vector<1x128xf32>
    %3 = vector.broadcast %1 : f32 to vector<1x128xf32>
    %4 = arith.mulf %3, %2 : vector<1x128xf32>
    %5 = vector.broadcast %0 : f32 to vector<1x128xf32>
    %6 = arith.addf %5, %4 : vector<1x128xf32>
    %c0_3 = arith.constant 0 : index
    %c0_4 = arith.constant 0 : index
    %7 = vector.load %arg4[%c0_3, %c0_4] : memref<1x128xf32, #tpu.memory_space<vmem>>, vector<1x128xf32>
    tpu.vector_store %arg4[%c0_3, %c0_4], %6 {strides = array<i32>} : memref<1x128xf32, #tpu.memory_space<vmem>>, vector<1x128xf32>,
    return
  }
  func.func @transform_0(%arg0: i32) -> i32 {
    %c0_i32 = arith.constant 0 : i32
    %c0_i32_0 = arith.constant 0 : i32
    return %c0_i32 : i32
  }
  func.func @transform_1(%arg0: i32) -> i32 {
    %c0_i32 = arith.constant 0 : i32
    %c0_i32_0 = arith.constant 0 : i32
    return %c0_i32 : i32
  }
  func.func @transform_2(%arg0: i32) -> (i32, i32) {
    %c0_i32 = arith.constant 0 : i32
    %c0_i32_0 = arith.constant 0 : i32
    return %arg0, %c0_i32 : i32, i32
  }
  func.func @transform_3(%arg0: i32) -> (i32, i32) {
    %c0_i32 = arith.constant 0 : i32
    %c0_i32_0 = arith.constant 0 : i32
    return %arg0, %c0_i32 : i32, i32
  }
}

</mosaic_0001>

<llo_original>
// kernel: manual_linear_regression.1
$region0: #{manual_linear_regression.1}
  #allocation0 [shape = 'u32[]', space=smem, size = 0x4, offset = 0x4, fixed_abs, tag = 'smem constant byte address 0x4 - core index']
  #allocation1 [shape = 'u32[144,128]{1,0:T(1,128)}', space=vmem, size = 0x12000, scoped, tag = 'internal scratch']
  #allocation2 [shape = 'f32[1]{0:T(128)S(6)}', space=smem, size = 0x200, scoped, tag = 'scoped memory for manual_linear_regression.1']
  #allocation3 [shape = 'f32[1]{0:T(128)S(6)}', space=smem, size = 0x200, scoped, tag = 'scoped memory for manual_linear_regression.1']
  %s0 = inlined_call_operand.<no memory space> [shape: f32[1], index: 0, kind: input, shape index: {}]
  %s1 = inlined_call_operand.<no memory space> [shape: f32[1], index: 1, kind: input, shape index: {}]
  %s2 = inlined_call_operand.vmem [shape: f32[1,128], index: 2, kind: input, shape index: {}]
  %s3 = inlined_call_operand.vmem [shape: f32[1,128], index: 3, kind: output, shape index: {}]
  %s4 = sld [smem:[#allocation0]]
  $region22: #{manual_linear_regression.1} parent=0
    _
  %s6 = ssub.s32 1, %s4
  %s7 = scalar_select 0, %s6, %s4
  %8 = sst [smem:[#allocation2]] %s0
  %9 = sst [smem:[#allocation3]] %s1
  // Predicated region
  $region2: #{manual_linear_regression.1} parent=0 // pred_check
    _
  $region3: #{manual_linear_regression.1} parent=0 // pred_check_branch
    %11 = sbr.rel (0) target = $region5
  $region4: #{manual_linear_regression.1} parent=0 // pred_region
    _
  $region5: #{manual_linear_regression.1} parent=0 // pred_fallthru
    _
  // Predicated region
  $region6: #{manual_linear_regression.1} parent=0 // pred_check
    _
  $region7: #{manual_linear_regression.1} parent=0 // pred_check_branch
    %13 = sbr.rel (0) target = $region9
  $region8: #{manual_linear_regression.1} parent=0 // pred_region
    _
  $region9: #{manual_linear_regression.1} parent=0 // pred_fallthru
    _
  // Predicated region
  $region10: #{manual_linear_regression.1} parent=0 // pred_check
    _
  $region11: #{manual_linear_regression.1} parent=0 // pred_check_branch
    %15 = sbr.rel (0) target = $region13
  $region12: #{manual_linear_regression.1} parent=0 // pred_region
    _
  $region13: #{manual_linear_regression.1} parent=0 // pred_fallthru
    _
  %s16 = sld [smem:[#allocation2]]
  %s17 = sld [smem:[#allocation3]]
  %v18 = vld [vmem:[%s2] sm:$0x1]
  %v19 = vstv %s17
  %v20 = vmul.f32 %v19, %v18
  %v21 = vstv %s16
  %v22 = vadd.f32 %v21, %v20
  %23 = vst [vmem:[%s3] sm:$0x1] %v22
  // Predicated region
  $region14: #{manual_linear_regression.1} parent=0 // pred_check
    _
  $region15: #{manual_linear_regression.1} parent=0 // pred_check_branch
    %25 = sbr.rel (0) target = $region17
  $region16: #{manual_linear_regression.1} parent=0 // pred_region
    _
  $region17: #{manual_linear_regression.1} parent=0 // pred_fallthru
    _
  // Predicated region
  $region18: #{manual_linear_regression.1} parent=0 // pred_check
    _
  $region19: #{manual_linear_regression.1} parent=0 // pred_check_branch
    %27 = sbr.rel (0) target = $region21
  $region20: #{manual_linear_regression.1} parent=0 // pred_region
    _
  $region21: #{manual_linear_regression.1} parent=0 // pred_fallthru
    _

</llo_original>
